<compile_context>
chip_gen: v7x
topology: tpu7x:2x2x1
jax: 0.10.0
libtpu: 0.0.40
codegen_flags: <defaults>
</compile_context>

<pallas_src>
import functools

import jax
import jax.numpy as jnp
from jax.experimental import pallas as pl
from jax.experimental.pallas import tpu as pltpu


# ----------------------------- Pallas kernel ---------------------------------

def _pos_extraction_kernel(x_ref, w1_ref, b1_ref, w2_ref, b2_ref, o_ref):
    """Full stack of ConvBNReLURes1D blocks on one (C, tn) activation tile.

    x_ref : (C, tn)            bf16 activation tile (channels on sublanes, points on lanes)
    w1_ref: (blocks, Cmid, C)  bf16 BN-folded conv1 weights
    b1_ref: (blocks, Cmid, 1)  f32  BN-folded conv1 biases
    w2_ref: (blocks, C, Cmid)  bf16 BN-folded conv2 weights
    b2_ref: (blocks, C, 1)     f32  BN-folded conv2 biases
    o_ref : (C, tn)            f32 output tile
    """
    nblocks = w1_ref.shape[0]
    x_bf = x_ref[...]                      # bf16 MXU operand straight from HBM
    x = x_bf.astype(jnp.float32)           # f32 residual accumulator (v5e-safe VPU path)

    # Static unroll over blocks: the activation tile never leaves VMEM/vregs.
    for blk in range(nblocks):
        # net1: conv(k=1) + BN (folded) + ReLU    (bf16 MXU operands, f32 accumulate)
        h = jnp.dot(w1_ref[blk], x_bf,
                    preferred_element_type=jnp.float32) + b1_ref[blk]
        h = jnp.maximum(h, 0.0)
        # net2: conv(k=1) + BN (folded) + ReLU
        y = jnp.dot(w2_ref[blk], h.astype(jnp.bfloat16),
                    preferred_element_type=jnp.float32) + b2_ref[blk]
        y = jnp.maximum(y, 0.0)
        # residual add + final ReLU (f32 on the VPU)
        x = jnp.maximum(y + x, 0.0)
        x_bf = x.astype(jnp.bfloat16)      # operand for the next block's first matmul

    o_ref[...] = x.astype(o_ref.dtype)


# ------------------------------ Tiling helpers --------------------------------

def _lane_tile(total, desired, min_steps=1):
    """Lane tile: a multiple of 128 (or the full extent). If min_steps>1 and the extent
    allows it, shrink so the grid has at least min_steps steps (v7x megacore)."""
    if desired >= total:
        t = total
    else:
        t = max(128, (desired // 128) * 128)
    if min_steps > 1 and total >= min_steps * 128 and pl.cdiv(total, t) < min_steps:
        t = max(128, (total // min_steps // 128) * 128)
    return t


def _vmem_limit_bytes(C, Cmid, tn, blocks):
    """Generation-aware VMEM budget sized from the actual buffer set."""
    try:
        cap = pltpu.get_tpu_info().vmem_capacity_bytes   # 128 MiB v5e/v6e, 64 MiB v7x
    except Exception:
        cap = 64 << 20                                   # conservative fallback
    pad8 = lambda c: ((c + 7) // 8) * 8
    x_buf = 2 * C * tn * 2                               # bf16 input tile, double buffered
    o_buf = 2 * C * tn * 4                               # f32 output tile, double buffered
    w_buf = 2 * blocks * Cmid * C * 2                    # W1+W2, bf16, single buffered
    b_buf = blocks * (pad8(Cmid) + pad8(C)) * 128 * 4    # biases, f32, lane-padded
    est = x_buf + o_buf + w_buf + b_buf + (8 << 20)      # + compiler scratch headroom
    return int(min(max(est, 16 << 20), cap * 3 // 4))    # leave 25% for the runtime


# --------------------------- Parameter setup (glue) ---------------------------

def _fold_bn_into_conv(w, b, gamma, beta, mean, var, eps=1e-5):
    """Fold eval-mode BatchNorm1d into a kernel_size=1 Conv1d (channels-first layout).

    w: (Cout, Cin) PyTorch conv weight (kernel dim squeezed), b: (Cout,)
    Returns w_fold (Cout, Cin) bf16 (MXU operand) and b_fold (Cout, 1) f32.
    """
    scale = gamma / jnp.sqrt(var + eps)                         # (Cout,)
    shift = beta - mean * scale                                 # (Cout,)
    w_fold = (w * scale[:, None]).astype(jnp.bfloat16)          # (Cout, Cin)
    b_fold = (b * scale + shift).astype(jnp.float32)[:, None]   # (Cout, 1)
    return w_fold, b_fold


def init_pos_extraction_params(key, channels, blocks=1, res_expansion=1):
    """Deterministic synthetic parameters, returned stacked over blocks."""
    mid = int(channels * res_expansion)
    w1s, b1s, w2s, b2s = [], [], [], []
    for _ in range(blocks):
        keys = jax.random.split(key, 13)
        key = keys[0]
        w1 = jax.random.normal(keys[1], (mid, channels), jnp.float32) * 0.1
        b1 = jax.random.normal(keys[2], (mid,), jnp.float32) * 0.1
        w2 = jax.random.normal(keys[3], (channels, mid), jnp.float32) * 0.1
        b2 = jax.random.normal(keys[4], (channels,), jnp.float32) * 0.1
        # BatchNorm1d eval-mode params (deterministic, non-trivial)
        g1 = 1.0 + 0.1 * jax.random.normal(keys[5], (mid,), jnp.float32)
        be1 = 0.1 * jax.random.normal(keys[6], (mid,), jnp.float32)
        m1 = 0.1 * jax.random.normal(keys[7], (mid,), jnp.float32)
        v1 = 0.5 + jnp.abs(jax.random.normal(keys[8], (mid,), jnp.float32))
        g2 = 1.0 + 0.1 * jax.random.normal(keys[9], (channels,), jnp.float32)
        be2 = 0.1 * jax.random.normal(keys[10], (channels,), jnp.float32)
        m2 = 0.1 * jax.random.normal(keys[11], (channels,), jnp.float32)
        v2 = 0.5 + jnp.abs(jax.random.normal(keys[12], (channels,), jnp.float32))

        w1f, b1f = _fold_bn_into_conv(w1, b1, g1, be1, m1, v1)
        w2f, b2f = _fold_bn_into_conv(w2, b2, g2, be2, m2, v2)
        w1s.append(w1f); b1s.append(b1f)
        w2s.append(w2f); b2s.append(b2f)
    return (jnp.stack(w1s), jnp.stack(b1s), jnp.stack(w2s), jnp.stack(b2s))


# ------------------------------ Forward wrapper -------------------------------

@functools.partial(jax.jit, static_argnames=("tn",))
def pos_extraction_forward(x_ncl, w1_all, b1_all, w2_all, b2_all, *, tn=512):
    """x_ncl: (B, C, N) matching the PyTorch NCL layout. Returns (B, C, N)."""
    B, C, N = x_ncl.shape
    blocks, Cmid, _ = w1_all.shape
    out_dtype = x_ncl.dtype

    # bf16 activation I/O: halves HBM->VMEM traffic; first MXU operand was bf16 anyway.
    x_bf = x_ncl.astype(jnp.bfloat16)

    # Single-buffered constant operands (their index_map never changes).
    def _const_specs(arity):
        zeros = lambda *args: (0, 0, 0)
        return [
            pl.BlockSpec((blocks, Cmid, C), zeros, pipeline_mode=pl.Buffered(1)),   # W1
            pl.BlockSpec((blocks, Cmid, 1), zeros, pipeline_mode=pl.Buffered(1)),   # b1
            pl.BlockSpec((blocks, C, Cmid), zeros, pipeline_mode=pl.Buffered(1)),   # W2
            pl.BlockSpec((blocks, C, 1), zeros, pipeline_mode=pl.Buffered(1)),      # b2
        ]

    fold = N < tn   # small per-sample N: fold batch into the lane dimension
    if fold:
        L = B * N
        tile = _lane_tile(L, tn, min_steps=2)             # >=2 steps for v7x's 2 TCs
        x2 = x_bf.transpose(1, 0, 2).reshape(C, L)        # (C, B*N), one cheap XLA transpose
        out2 = pl.pallas_call(
            _pos_extraction_kernel,
            out_shape=jax.ShapeDtypeStruct((C, L), out_dtype),
            grid_spec=pltpu.PrefetchScalarGridSpec(
                num_scalar_prefetch=0,
                grid=(pl.cdiv(L, tile),),
                in_specs=[pl.BlockSpec((C, tile), lambda n: (0, n))] + _const_specs(1),
                out_specs=pl.BlockSpec((C, tile), lambda n: (0, n)),
            ),
            compiler_params=pltpu.CompilerParams(
                dimension_semantics=("parallel",),
                vmem_limit_bytes=_vmem_limit_bytes(C, Cmid, tile, blocks),
            ),
        )(x2, w1_all, b1_all, w2_all, b2_all)
        return out2.reshape(C, B, N).transpose(1, 0, 2)

    # Large N: tile the (B, C, N) tensor directly (no transpose pass over HBM).
    tile = _lane_tile(N, tn, min_steps=2 if B == 1 else 1)
    # NOTE: if xprof ever shows exposed input DMA at large C/tile, add
    # pipeline_mode=pl.Buffered(3) to the x BlockSpec below (cheap insurance).
    return pl.pallas_call(
        _pos_extraction_kernel,
        out_shape=jax.ShapeDtypeStruct((B, C, N), out_dtype),
        grid_spec=pltpu.PrefetchScalarGridSpec(
            num_scalar_prefetch=0,
            grid=(B, pl.cdiv(N, tile)),
            in_specs=[pl.BlockSpec((None, C, tile), lambda b, n: (b, 0, n))]
                     + _const_specs(2),
            out_specs=pl.BlockSpec((None, C, tile), lambda b, n: (b, 0, n)),
        ),
        compiler_params=pltpu.CompilerParams(
            dimension_semantics=("parallel", "parallel"),
            vmem_limit_bytes=_vmem_limit_bytes(C, Cmid, tile, blocks),
        ),
    )(x_bf, w1_all, b1_all, w2_all, b2_all)


# ------------------------------ Pure-JAX reference ----------------------------

def _reference(x_ncl, w1_all, b1_all, w2_all, b2_all):
    """Mirrors the kernel numerics (bf16 activations/operands, f32 accumulate/elementwise)."""
    x_bf = x_ncl.astype(jnp.bfloat16)
    x = x_bf.astype(jnp.float32)
    blocks = w1_all.shape[0]
    for blk in range(blocks):
        w1, b1 = w1_all[blk], b1_all[blk]
        w2, b2 = w2_all[blk], b2_all[blk]
        h = jnp.einsum("mc,bcn->bmn", w1, x_bf,
                       preferred_element_type=jnp.float32) + b1[None]
        h = jnp.maximum(h, 0.0)
        y = jnp.einsum("cm,bmn->bcn", w2, h.astype(jnp.bfloat16),
                       preferred_element_type=jnp.float32) + b2[None]
        y = jnp.maximum(y, 0.0)
        x = jnp.maximum(y + x, 0.0)
        x_bf = x.astype(jnp.bfloat16)
    return x


# ----------------------------------- Main -------------------------------------

if __name__ == "__main__":
    B, C, N = 2, 32, 256         # (batch, channels, num_points) -- PyTorch NCL layout
    blocks, res_expansion = 2, 1

    key = jax.random.PRNGKey(0)
    kx, kp = jax.random.split(key)
    x = jax.random.normal(kx, (B, C, N), jnp.float32)
    w1_all, b1_all, w2_all, b2_all = init_pos_extraction_params(
        kp, C, blocks=blocks, res_expansion=res_expansion)

    out = pos_extraction_forward(x, w1_all, b1_all, w2_all, b2_all, tn=512)
    out = jax.block_until_ready(out)

    ref = _reference(x, w1_all, b1_all, w2_all, b2_all)
    assert out.shape == (B, C, N)
    assert jnp.allclose(out, ref, atol=2e-3, rtol=2e-3), "mismatch vs reference"

    print("KERNEL_OK")
</pallas_src>

<mosaic_0001>
module attributes {stable_mosaic.version = 11 : i64} {
  func.func @_pos_extraction_kernel(%arg0: i32, %arg1: memref<32x256xbf16, #tpu.memory_space<vmem>>, %arg2: memref<2x32x32xbf16, #tpu.memory_space<vmem>>, %arg3: memref<2x32x1xf32, #tpu.memory_space<vmem>>, %arg4: memref<2x32x32xbf16, #tpu.memory_space<vmem>>, %arg5: memref<2x32x1xf32, #tpu.memory_space<vmem>>, %arg6: memref<32x256xf32, #tpu.memory_space<vmem>>) attributes {dimension_semantics = [#tpu.dimension_semantics<parallel>], iteration_bounds = array<i64: 2>, scalar_prefetch = 0 : i64, scratch_operands = 0 : i64, tpu.core_type = #tpu.core_type<tc>, window_params = [{transform_indices = @transform_0, window_bounds = array<i64: 32, 256>}, {pipeline_mode = #tpu.pipeline_mode<synchronous>, transform_indices = @transform_1, window_bounds = array<i64: 2, 32, 32>}, {pipeline_mode = #tpu.pipeline_mode<synchronous>, transform_indices = @transform_2, window_bounds = array<i64: 2, 32, 1>}, {pipeline_mode = #tpu.pipeline_mode<synchronous>, transform_indices = @transform_3, window_bounds = array<i64: 2, 32, 32>}, {pipeline_mode = #tpu.pipeline_mode<synchronous>, transform_indices = @transform_4, window_bounds = array<i64: 2, 32, 1>}, {transform_indices = @transform_5, window_bounds = array<i64: 32, 256>}]} {
    %c0 = arith.constant 0 : index
    %c0_0 = arith.constant 0 : index
    %0 = vector.load %arg1[%c0, %c0_0] : memref<32x256xbf16, #tpu.memory_space<vmem>>, vector<32x256xbf16>
    %1 = arith.extf %0 : vector<32x256xbf16> to vector<32x256xf32>
    %c0_1 = arith.constant 0 : index
    %c0_2 = arith.constant 0 : index
    %c0_3 = arith.constant 0 : index
    %2 = vector.load %arg2[%c0_1, %c0_2, %c0_3] : memref<2x32x32xbf16, #tpu.memory_space<vmem>>, vector<1x32x32xbf16>
    %3 = vector.shape_cast %2 : vector<1x32x32xbf16> to vector<32x32xbf16>
    %cst = arith.constant dense<0.000000e+00> : vector<32x256xf32>
    %4 = tpu.matmul %3, %0, %cst {dimension_numbers = #tpu.dot_dimension_numbers<[1], [0], [0], [1], [0, 0, 1, 1], [], []>} : vector<32x32xbf16>, vector<32x256xbf16>, vector<32x256xf32> -> vector<32x256xf32>
    %c0_4 = arith.constant 0 : index
    %c0_5 = arith.constant 0 : index
    %c0_6 = arith.constant 0 : index
    %5 = vector.load %arg3[%c0_4, %c0_5, %c0_6] : memref<2x32x1xf32, #tpu.memory_space<vmem>>, vector<1x32x1xf32>
    %6 = vector.shape_cast %5 : vector<1x32x1xf32> to vector<32x1xf32>
    %7 = vector.broadcast %6 : vector<32x1xf32> to vector<32x256xf32>
    %8 = arith.addf %4, %7 : vector<32x256xf32>
    %cst_7 = arith.constant 0.000000e+00 : f32
    %9 = vector.broadcast %cst_7 : f32 to vector<32x256xf32>
    %10 = arith.maximumf %8, %9 : vector<32x256xf32>
    %c0_8 = arith.constant 0 : index
    %c0_9 = arith.constant 0 : index
    %c0_10 = arith.constant 0 : index
    %11 = vector.load %arg4[%c0_8, %c0_9, %c0_10] : memref<2x32x32xbf16, #tpu.memory_space<vmem>>, vector<1x32x32xbf16>
    %12 = vector.shape_cast %11 : vector<1x32x32xbf16> to vector<32x32xbf16>
    %13 = arith.truncf %10 : vector<32x256xf32> to vector<32x256xbf16>
    %cst_11 = arith.constant dense<0.000000e+00> : vector<32x256xf32>
    %14 = tpu.matmul %12, %13, %cst_11 {dimension_numbers = #tpu.dot_dimension_numbers<[1], [0], [0], [1], [0, 0, 1, 1], [], []>} : vector<32x32xbf16>, vector<32x256xbf16>, vector<32x256xf32> -> vector<32x256xf32>
    %c0_12 = arith.constant 0 : index
    %c0_13 = arith.constant 0 : index
    %c0_14 = arith.constant 0 : index
    %15 = vector.load %arg5[%c0_12, %c0_13, %c0_14] : memref<2x32x1xf32, #tpu.memory_space<vmem>>, vector<1x32x1xf32>
    %16 = vector.shape_cast %15 : vector<1x32x1xf32> to vector<32x1xf32>
    %17 = vector.broadcast %16 : vector<32x1xf32> to vector<32x256xf32>
    %18 = arith.addf %14, %17 : vector<32x256xf32>
    %cst_15 = arith.constant 0.000000e+00 : f32
    %19 = vector.broadcast %cst_15 : f32 to vector<32x256xf32>
    %20 = arith.maximumf %18, %19 : vector<32x256xf32>
    %21 = arith.addf %20, %1 : vector<32x256xf32>
    %cst_16 = arith.constant 0.000000e+00 : f32
    %22 = vector.broadcast %cst_16 : f32 to vector<32x256xf32>
    %23 = arith.maximumf %21, %22 : vector<32x256xf32>
    %24 = arith.truncf %23 : vector<32x256xf32> to vector<32x256xbf16>
    %c1 = arith.constant 1 : index
    %c0_17 = arith.constant 0 : index
    %c0_18 = arith.constant 0 : index
    %25 = vector.load %arg2[%c1, %c0_17, %c0_18] : memref<2x32x32xbf16, #tpu.memory_space<vmem>>, vector<1x32x32xbf16>
    %26 = vector.shape_cast %25 : vector<1x32x32xbf16> to vector<32x32xbf16>
    %cst_19 = arith.constant dense<0.000000e+00> : vector<32x256xf32>
    %27 = tpu.matmul %26, %24, %cst_19 {dimension_numbers = #tpu.dot_dimension_numbers<[1], [0], [0], [1], [0, 0, 1, 1], [], []>} : vector<32x32xbf16>, vector<32x256xbf16>, vector<32x256xf32> -> vector<32x256xf32>
    %c1_20 = arith.constant 1 : index
    %c0_21 = arith.constant 0 : index
    %c0_22 = arith.constant 0 : index
    %28 = vector.load %arg3[%c1_20, %c0_21, %c0_22] : memref<2x32x1xf32, #tpu.memory_space<vmem>>, vector<1x32x1xf32>
    %29 = vector.shape_cast %28 : vector<1x32x1xf32> to vector<32x1xf32>
    %30 = vector.broadcast %29 : vector<32x1xf32> to vector<32x256xf32>
    %31 = arith.addf %27, %30 : vector<32x256xf32>
    %cst_23 = arith.constant 0.000000e+00 : f32
    %32 = vector.broadcast %cst_23 : f32 to vector<32x256xf32>
    %33 = arith.maximumf %31, %32 : vector<32x256xf32>
    %c1_24 = arith.constant 1 : index
    %c0_25 = arith.constant 0 : index
    %c0_26 = arith.constant 0 : index
    %34 = vector.load %arg4[%c1_24, %c0_25, %c0_26] : memref<2x32x32xbf16, #tpu.memory_space<vmem>>, vector<1x32x32xbf16>
    %35 = vector.shape_cast %34 : vector<1x32x32xbf16> to vector<32x32xbf16>
    %36 = arith.truncf %33 : vector<32x256xf32> to vector<32x256xbf16>
    %cst_27 = arith.constant dense<0.000000e+00> : vector<32x256xf32>
    %37 = tpu.matmul %35, %36, %cst_27 {dimension_numbers = #tpu.dot_dimension_numbers<[1], [0], [0], [1], [0, 0, 1, 1], [], []>} : vector<32x32xbf16>, vector<32x256xbf16>, vector<32x256xf32> -> vector<32x256xf32>
    %c1_28 = arith.constant 1 : index
    %c0_29 = arith.constant 0 : index
    %c0_30 = arith.constant 0 : index
    %38 = vector.load %arg5[%c1_28, %c0_29, %c0_30] : memref<2x32x1xf32, #tpu.memory_space<vmem>>, vector<1x32x1xf32>
    %39 = vector.shape_cast %38 : vector<1x32x1xf32> to vector<32x1xf32>
    %40 = vector.broadcast %39 : vector<32x1xf32> to vector<32x256xf32>
    %41 = arith.addf %37, %40 : vector<32x256xf32>
    %cst_31 = arith.constant 0.000000e+00 : f32
    %42 = vector.broadcast %cst_31 : f32 to vector<32x256xf32>
    %43 = arith.maximumf %41, %42 : vector<32x256xf32>
    %44 = arith.addf %43, %23 : vector<32x256xf32>
    %cst_32 = arith.constant 0.000000e+00 : f32
    %45 = vector.broadcast %cst_32 : f32 to vector<32x256xf32>
    %46 = arith.maximumf %44, %45 : vector<32x256xf32>
    %c0_33 = arith.constant 0 : index
    %c0_34 = arith.constant 0 : index
    %47 = vector.load %arg6[%c0_33, %c0_34] : memref<32x256xf32, #tpu.memory_space<vmem>>, vector<32x256xf32>
    tpu.vector_store %arg6[%c0_33, %c0_34], %46 {strides = array<i32>} : memref<32x256xf32, #tpu.memory_space<vmem>>, vector<32x256xf32>,
    return
  }
  func.func @transform_0(%arg0: i32) -> (i32, i32) {
    %c0_i32 = arith.constant 0 : i32
    %c0_i32_0 = arith.constant 0 : i32
    return %c0_i32, %arg0 : i32, i32
  }
  func.func @transform_1(%arg0: i32) -> (i32, i32, i32) {
    %c0_i32 = arith.constant 0 : i32
    %c0_i32_0 = arith.constant 0 : i32
    %c0_i32_1 = arith.constant 0 : i32
    %c0_i32_2 = arith.constant 0 : i32
    return %c0_i32, %c0_i32_0, %c0_i32_1 : i32, i32, i32
  }
  func.func @transform_2(%arg0: i32) -> (i32, i32, i32) {
    %c0_i32 = arith.constant 0 : i32
    %c0_i32_0 = arith.constant 0 : i32
    %c0_i32_1 = arith.constant 0 : i32
    %c0_i32_2 = arith.constant 0 : i32
    return %c0_i32, %c0_i32_0, %c0_i32_1 : i32, i32, i32
  }
  func.func @transform_3(%arg0: i32) -> (i32, i32, i32) {
    %c0_i32 = arith.constant 0 : i32
    %c0_i32_0 = arith.constant 0 : i32
    %c0_i32_1 = arith.constant 0 : i32
    %c0_i32_2 = arith.constant 0 : i32
    return %c0_i32, %c0_i32_0, %c0_i32_1 : i32, i32, i32
  }
  func.func @transform_4(%arg0: i32) -> (i32, i32, i32) {
    %c0_i32 = arith.constant 0 : i32
    %c0_i32_0 = arith.constant 0 : i32
    %c0_i32_1 = arith.constant 0 : i32
    %c0_i32_2 = arith.constant 0 : i32
    return %c0_i32, %c0_i32_0, %c0_i32_1 : i32, i32, i32
  }
  func.func @transform_5(%arg0: i32) -> (i32, i32) {
    %c0_i32 = arith.constant 0 : i32
    %c0_i32_0 = arith.constant 0 : i32
    return %c0_i32, %arg0 : i32, i32
  }
}

</mosaic_0001>

<llo_original>
// kernel: pos_extraction_forward.1
$region0: #{pos_extraction_forward.1}
  #allocation0 [shape = 'u32[]', space=smem, size = 0x4, offset = 0x4, fixed_abs, tag = 'smem constant byte address 0x4 - core index']
  #allocation1 [shape = 'u32[144,128]{1,0:T(1,128)}', space=vmem, size = 0x12000, scoped, tag = 'internal scratch']
  %s0 = inlined_call_operand.vmem [shape: bf16[32,512], index: 0, kind: input, shape index: {}]
  %s1 = inlined_call_operand.vmem [shape: bf16[2,32,32], index: 1, kind: input, shape index: {}]
  %s2 = inlined_call_operand.vmem [shape: f32[2,32,1], index: 2, kind: input, shape index: {}]
  %s3 = inlined_call_operand.vmem [shape: bf16[2,32,32], index: 3, kind: input, shape index: {}]
  %s4 = inlined_call_operand.vmem [shape: f32[2,32,1], index: 4, kind: input, shape index: {}]
  %s5 = inlined_call_operand.vmem [shape: f32[32,512], index: 5, kind: output, shape index: {}]
  %s6 = sld [smem:[#allocation0]]
  $region110: #{pos_extraction_forward.1} parent=0
    _
  %s8 = ssub.s32 1, %s6
  %s9 = scalar_select 0, %s8, %s6
  $region1: #{pos_extraction_forward.1} parent=0
    #allocation2 [shape = 'u8[32768]{0}', space=vmem, size = 0x8000, scoped, tag = 'input window, operand 0']
    #allocation3 [shape = 'u8[65536]{0}', space=vmem, size = 0x10000, scoped, tag = 'output window, operand 0']
    loop: start=0, step=1, limit=4
    $region2: #{pos_extraction_forward.1} parent=1 // loop_pre_header
      _
    $region3: #{pos_extraction_forward.1} parent=1 // loop_header
      %s11 = sphi 0, %s15
      %p12 = scmp.ge.s32.totalorder %s11, 4
      %s21 = sphi 0, %s23
      %s24 = sphi 0, %s21
      %s25 = sphi 0, %s24
      %s41 = sphi 0, %s25
      %s45 = sphi 0, %s45
      %s47 = sphi 0, %s45
      %s48 = sphi 0, %s47
      %s62 = sphi 0, %s48
      %s66 = sphi 0, %s66
      %s68 = sphi 0, %s66
      %s69 = sphi 0, %s68
      %s83 = sphi 0, %s69
      %s87 = sphi 0, %s87
      %s89 = sphi 0, %s87
      %s90 = sphi 0, %s89
      %s104 = sphi 0, %s90
      %s108 = sphi 0, %s108
      %s110 = sphi 0, %s108
      %s111 = sphi 0, %s110
      %s125 = sphi 0, %s111
      %s131 = sphi 0, %s133
      %s134 = sphi 0, %s131
      %s135 = sphi 0, %s134
      %s151 = sphi 0, %s135
    $region4: #{pos_extraction_forward.1} parent=1 // loop_header_branch
      %14 = sbr.rel (%p12) target = $region8
    $region5: #{pos_extraction_forward.1} parent=1 // loop_body
      %s16 = ssub.s32 %s11, 1
      %s17 = ssub.s32 %s11, 2
      %s18 = sadd.s32 %s11, 1
      %s19 = ssub.s32 %s11, %s18
      %p20 = scmp.eq.s32.totalorder %s19, 0
      %s22 = sadd.s32 %s21, 1
      %s23 = scalar_select %p20, %s21, %s22
      %p26 = pneg %p20
      %p27 = scmp.eq.s32.totalorder %s11, 1
      %p28 = por %p26, %p27
      %p29 = scmp.ne.s32.totalorder %s21, %s24
      %p30 = scmp.eq.s32.totalorder %s11, 0
      %p31 = por %p29, %p30
      %p32 = scmp.ne.s32.totalorder %s21, %s24
      %p33 = scmp.eq.s32.totalorder %s16, 1
      %p34 = por %p32, %p33
      %p35 = scmp.ne.s32.totalorder %s24, %s25
      %p36 = scmp.eq.s32.totalorder %s16, 0
      %p37 = por %p35, %p36
      %p38 = scmp.ne.s32.totalorder %s24, %s25
      %p39 = scmp.eq.s32.totalorder %s17, 1
      %p40 = por %p38, %p39
      %p42 = scmp.ne.s32.totalorder %s25, %s41
      %p43 = scmp.eq.s32.totalorder %s17, 0
      %p44 = por %p42, %p43
      %s46 = sadd.s32 %s45, 1
      %p49 = scmp.eq.s32.totalorder %s11, 1
      %p50 = scmp.ne.s32.totalorder %s45, %s47
      %p51 = scmp.eq.s32.totalorder %s11, 0
      %p52 = por %p50, %p51
      %p53 = scmp.ne.s32.totalorder %s45, %s47
      %p54 = scmp.eq.s32.totalorder %s16, 1
      %p55 = por %p53, %p54
      %p56 = scmp.ne.s32.totalorder %s47, %s48
      %p57 = scmp.eq.s32.totalorder %s16, 0
      %p58 = por %p56, %p57
      %p59 = scmp.ne.s32.totalorder %s47, %s48
      %p60 = scmp.eq.s32.totalorder %s17, 1
      %p61 = por %p59, %p60
      %p63 = scmp.ne.s32.totalorder %s48, %s62
      %p64 = scmp.eq.s32.totalorder %s17, 0
      %p65 = por %p63, %p64
      %s67 = sadd.s32 %s66, 1
      %p70 = scmp.eq.s32.totalorder %s11, 1
      %p71 = scmp.ne.s32.totalorder %s66, %s68
      %p72 = scmp.eq.s32.totalorder %s11, 0
      %p73 = por %p71, %p72
      %p74 = scmp.ne.s32.totalorder %s66, %s68
      %p75 = scmp.eq.s32.totalorder %s16, 1
      %p76 = por %p74, %p75
      %p77 = scmp.ne.s32.totalorder %s68, %s69
      %p78 = scmp.eq.s32.totalorder %s16, 0
      %p79 = por %p77, %p78
      %p80 = scmp.ne.s32.totalorder %s68, %s69
      %p81 = scmp.eq.s32.totalorder %s17, 1
      %p82 = por %p80, %p81
      %p84 = scmp.ne.s32.totalorder %s69, %s83
      %p85 = scmp.eq.s32.totalorder %s17, 0
      %p86 = por %p84, %p85
      %s88 = sadd.s32 %s87, 1
      %p91 = scmp.eq.s32.totalorder %s11, 1
      %p92 = scmp.ne.s32.totalorder %s87, %s89
      %p93 = scmp.eq.s32.totalorder %s11, 0
      %p94 = por %p92, %p93
      %p95 = scmp.ne.s32.totalorder %s87, %s89
      %p96 = scmp.eq.s32.totalorder %s16, 1
      %p97 = por %p95, %p96
      %p98 = scmp.ne.s32.totalorder %s89, %s90
      %p99 = scmp.eq.s32.totalorder %s16, 0
      %p100 = por %p98, %p99
      %p101 = scmp.ne.s32.totalorder %s89, %s90
      %p102 = scmp.eq.s32.totalorder %s17, 1
      %p103 = por %p101, %p102
      %p105 = scmp.ne.s32.totalorder %s90, %s104
      %p106 = scmp.eq.s32.totalorder %s17, 0
      %p107 = por %p105, %p106
      %s109 = sadd.s32 %s108, 1
      %p112 = scmp.eq.s32.totalorder %s11, 1
      %p113 = scmp.ne.s32.totalorder %s108, %s110
      %p114 = scmp.eq.s32.totalorder %s11, 0
      %p115 = por %p113, %p114
      %p116 = scmp.ne.s32.totalorder %s108, %s110
      %p117 = scmp.eq.s32.totalorder %s16, 1
      %p118 = por %p116, %p117
      %p119 = scmp.ne.s32.totalorder %s110, %s111
      %p120 = scmp.eq.s32.totalorder %s16, 0
      %p121 = por %p119, %p120
      %p122 = scmp.ne.s32.totalorder %s110, %s111
      %p123 = scmp.eq.s32.totalorder %s17, 1
      %p124 = por %p122, %p123
      %p126 = scmp.ne.s32.totalorder %s111, %s125
      %p127 = scmp.eq.s32.totalorder %s17, 0
      %p128 = por %p126, %p127
      %s129 = ssub.s32 %s11, %s18
      %p130 = scmp.eq.s32.totalorder %s129, 0
      %s132 = sadd.s32 %s131, 1
      %s133 = scalar_select %p130, %s131, %s132
      %p136 = pneg %p130
      %p137 = scmp.eq.s32.totalorder %s11, 1
      %p138 = por %p136, %p137
      %p139 = scmp.ne.s32.totalorder %s131, %s134
      %p140 = scmp.eq.s32.totalorder %s11, 0
      %p141 = por %p139, %p140
      %p142 = scmp.ne.s32.totalorder %s131, %s134
      %p143 = scmp.eq.s32.totalorder %s16, 1
      %p144 = por %p142, %p143
      %p145 = scmp.ne.s32.totalorder %s134, %s135
      %p146 = scmp.eq.s32.totalorder %s16, 0
      %p147 = por %p145, %p146
      %p148 = scmp.ne.s32.totalorder %s134, %s135
      %p149 = scmp.eq.s32.totalorder %s17, 1
      %p150 = por %p148, %p149
      %p152 = scmp.ne.s32.totalorder %s135, %s151
      %p153 = scmp.eq.s32.totalorder %s17, 0
      %p154 = por %p152, %p153
      %p155 = scmp.le.s32.totalorder 1, %s11
      %p156 = scmp.lt.s32.totalorder %s11, 3
      %p157 = pnand %p155, %p156
      %p158 = pneg %p157
      // Predicated region
      $region9: #{pos_extraction_forward.1} parent=5 // pred_check
        _
      $region10: #{pos_extraction_forward.1} parent=5 // pred_check_branch
        %160 = sbr.rel (%p157) target = $region12
      $region11: #{pos_extraction_forward.1} parent=5 // pred_region
        %s161 = ssub.s32 %s11, 1
        // Predicated region
        $region13: #{pos_extraction_forward.1} parent=11 // pred_check
          %p162 = pneg %p58
        $region14: #{pos_extraction_forward.1} parent=11 // pred_check_branch
          %164 = sbr.rel (%p162) target = $region16
        $region15: #{pos_extraction_forward.1} parent=11 // pred_region
          _
        $region16: #{pos_extraction_forward.1} parent=11 // pred_fallthru
          _
        // Predicated region
        $region17: #{pos_extraction_forward.1} parent=11 // pred_check
          %p165 = pneg %p79
        $region18: #{pos_extraction_forward.1} parent=11 // pred_check_branch
          %167 = sbr.rel (%p165) target = $region20
        $region19: #{pos_extraction_forward.1} parent=11 // pred_region
          _
        $region20: #{pos_extraction_forward.1} parent=11 // pred_fallthru
          _
        // Predicated region
        $region21: #{pos_extraction_forward.1} parent=11 // pred_check
          %p168 = pneg %p100
        $region22: #{pos_extraction_forward.1} parent=11 // pred_check_branch
          %170 = sbr.rel (%p168) target = $region24
        $region23: #{pos_extraction_forward.1} parent=11 // pred_region
          _
        $region24: #{pos_extraction_forward.1} parent=11 // pred_fallthru
          _
        // Predicated region
        $region25: #{pos_extraction_forward.1} parent=11 // pred_check
          %p171 = pneg %p121
        $region26: #{pos_extraction_forward.1} parent=11 // pred_check_branch
          %173 = sbr.rel (%p171) target = $region28
        $region27: #{pos_extraction_forward.1} parent=11 // pred_region
          _
        $region28: #{pos_extraction_forward.1} parent=11 // pred_fallthru
          _
      $region12: #{pos_extraction_forward.1} parent=5 // pred_fallthru
        _
      %p174 = scmp.lt.s32.totalorder %s11, 2
      // Predicated region
      $region29: #{pos_extraction_forward.1} parent=5 // pred_check
        %p175 = pneg %p174
      $region30: #{pos_extraction_forward.1} parent=5 // pred_check_branch
        %177 = sbr.rel (%p175) target = $region32
      $region31: #{pos_extraction_forward.1} parent=5 // pred_region
        // Predicated region
        $region33: #{pos_extraction_forward.1} parent=31 // pred_check
          %p178 = pneg %p31
        $region34: #{pos_extraction_forward.1} parent=31 // pred_check_branch
          %180 = sbr.rel (%p178) target = $region36
        $region35: #{pos_extraction_forward.1} parent=31 // pred_region
          %s181 = sand.u32 %s21, 1
          %s182 = sand.u32 %s21, 1
          %s183 = smul.addr %s182, 32
          %s184 = scalar_lea.vmem [#allocation2], %s183
          %s185 = smul.u32 2, %s11
          %s186 = smul.addr %s185, 4
          %s187 = scalar_lea.vmem %s0, %s186
          // Predicated region
          $region37: #{pos_extraction_forward.1} parent=35 // pred_check
            _
          $region38: #{pos_extraction_forward.1} parent=35 // pred_check_branch
            %189 = sbr.rel (0) target = $region40
          $region39: #{pos_extraction_forward.1} parent=35 // pred_region
            // Predicated region
            $region41: #{pos_extraction_forward.1} parent=39 // pred_check
              _
            $region42: #{pos_extraction_forward.1} parent=39 // pred_check_branch
              %191 = sbr.rel (0) target = $region44
            $region43: #{pos_extraction_forward.1} parent=39 // pred_region
              // Predicated region
              $region56: #{pos_extraction_forward.1} parent=43 // pred_check
                _
              $region57: #{pos_extraction_forward.1} parent=43 // pred_check_branch
                %212 = sbr.rel (0) target = $region59
              $region58: #{pos_extraction_forward.1} parent=43 // pred_region
                loop: start=0, step=1, limit=1
                $region60: #{pos_extraction_forward.1} parent=58 // loop_pre_header
                  _
                $region61: #{pos_extraction_forward.1} parent=58 // loop_header
                  %s214 = sphi 0, %s218
                  %p215 = scmp.ge.s32.totalorder %s214, 1
                  %s219 = sphi %s187, %s187
                  %s220 = sphi %s184, %s184
                $region62: #{pos_extraction_forward.1} parent=58 // loop_header_branch
                  %217 = sbr.rel (%p215) target = $region66
                $region63: #{pos_extraction_forward.1} parent=58 // loop_body
                  %v221 = vld [vmem:[%s219] sm:$0xff]
                  %222 = vst [vmem:[%s220] sm:$0xff] %v221
                  %v223 = vld [vmem:[%s219 + $0x10] sm:$0xff]
                  %224 = vst [vmem:[%s220 + $0x8] sm:$0xff] %v223
                  %v225 = vld [vmem:[%s219 + $0x20] sm:$0xff]
                  %226 = vst [vmem:[%s220 + $0x10] sm:$0xff] %v225
                  %v227 = vld [vmem:[%s219 + $0x30] sm:$0xff]
                  %228 = vst [vmem:[%s220 + $0x18] sm:$0xff] %v227
                $region64: #{pos_extraction_forward.1} parent=58 // loop_footer
                  %s218 = sadd.s32 1, %s214
                $region65: #{pos_extraction_forward.1} parent=58 // loop_footer_branch
                  %213 = sbr.rel target = $region61
                $region66: #{pos_extraction_forward.1} parent=58 // loop_exit
                  _
              $region59: #{pos_extraction_forward.1} parent=43 // pred_fallthru
                _
              // Predicated region
              $region67: #{pos_extraction_forward.1} parent=43 // pred_check
                _
              $region68: #{pos_extraction_forward.1} parent=43 // pred_check_branch
                %230 = sbr.rel target = $region70
              $region69: #{pos_extraction_forward.1} parent=43 // pred_region
                _
              $region70: #{pos_extraction_forward.1} parent=43 // pred_fallthru
                _
            $region44: #{pos_extraction_forward.1} parent=39 // pred_fallthru
              _
            // Predicated region
            $region45: #{pos_extraction_forward.1} parent=39 // pred_check
              _
            $region46: #{pos_extraction_forward.1} parent=39 // pred_check_branch
              %193 = sbr.rel target = $region48
            $region47: #{pos_extraction_forward.1} parent=39 // pred_region
              loop: start=0, step=1, limit=1
              $region49: #{pos_extraction_forward.1} parent=47 // loop_pre_header
                _
              $region50: #{pos_extraction_forward.1} parent=47 // loop_header
                %s196 = sphi 0, %s200
                %p197 = scmp.ge.s32.totalorder %s196, 1
                %s201 = sphi %s187, %s187
                %s202 = sphi %s184, %s184
              $region51: #{pos_extraction_forward.1} parent=47 // loop_header_branch
                %199 = sbr.rel (%p197) target = $region55
              $region52: #{pos_extraction_forward.1} parent=47 // loop_body
                %v203 = vld [vmem:[%s201] sm:$0xff]
                %204 = vst [vmem:[%s202] sm:$0xff] %v203
                %v205 = vld [vmem:[%s201 + $0x10] sm:$0xff]
                %206 = vst [vmem:[%s202 + $0x8] sm:$0xff] %v205
                %v207 = vld [vmem:[%s201 + $0x20] sm:$0xff]
                %208 = vst [vmem:[%s202 + $0x10] sm:$0xff] %v207
                %v209 = vld [vmem:[%s201 + $0x30] sm:$0xff]
                %210 = vst [vmem:[%s202 + $0x18] sm:$0xff] %v209
              $region53: #{pos_extraction_forward.1} parent=47 // loop_footer
                %s200 = sadd.s32 1, %s196
              $region54: #{pos_extraction_forward.1} parent=47 // loop_footer_branch
                %195 = sbr.rel target = $region50
              $region55: #{pos_extraction_forward.1} parent=47 // loop_exit
                _
            $region48: #{pos_extraction_forward.1} parent=39 // pred_fallthru
              _
          $region40: #{pos_extraction_forward.1} parent=35 // pred_fallthru
            _
          %231 = vnop
        $region36: #{pos_extraction_forward.1} parent=31 // pred_fallthru
          _
      $region32: #{pos_extraction_forward.1} parent=5 // pred_fallthru
        _
      %p232 = scmp.le.s32.totalorder 1, %s11
      %p233 = scmp.lt.s32.totalorder %s11, 3
      %p234 = pnand %p232, %p233
      %p235 = pneg %p234
      // Predicated region
      $region71: #{pos_extraction_forward.1} parent=5 // pred_check
        _
      $region72: #{pos_extraction_forward.1} parent=5 // pred_check_branch
        %237 = sbr.rel (%p234) target = $region74
      $region73: #{pos_extraction_forward.1} parent=5 // pred_region
        %s238 = ssub.s32 %s11, 1
        %s239 = sand.u32 %s24, 1
        %s240 = sand.u32 %s24, 1
        %s241 = smul.addr %s240, 32
        %s242 = scalar_lea.vmem [#allocation2], %s241
        // Predicated region
        $region75: #{pos_extraction_forward.1} parent=73 // pred_check
          %p243 = pneg %p37
        $region76: #{pos_extraction_forward.1} parent=73 // pred_check_branch
          %245 = sbr.rel (%p243) target = $region78
        $region77: #{pos_extraction_forward.1} parent=73 // pred_region
          _
        $region78: #{pos_extraction_forward.1} parent=73 // pred_fallthru
          _
        %s246 = sand.u32 %s24, 1
        %s247 = sand.u32 %s24, 1
        %s248 = smul.addr %s247, 32
        %s249 = scalar_lea.vmem [#allocation2], %s248
        %p250 = pneg %p37
        %p251 = pneg %p34
        %p252 = pneg %p58
        %p253 = pneg %p55
        %p254 = pneg %p79
        %p255 = pneg %p76
        %p256 = pneg %p100
        %p257 = pneg %p97
        %p258 = pneg %p121
        %p259 = pneg %p118
        %p260 = pneg %p147
        %p261 = pneg %p144
        %s262 = sand.u32 %s134, 1
        %s263 = sand.u32 %s134, 1
        %s264 = smul.addr %s263, 64
        %s265 = scalar_lea.vmem [#allocation3], %s264
        %s266 = smul.u32 2, %s16
        %s267 = smul.u32 2, %s16
        %v269 = vld [vmem:[%s242] sm:$0xff]
        %v270 = vld [vmem:[%s242 + $0x8] sm:$0xff]
        %v271 = vld [vmem:[%s242 + $0x10] sm:$0xff]
        %v272 = vld [vmem:[%s242 + $0x18] sm:$0xff]
        %v273 = vunpack.c.l.bf16 %v269
        %v274 = vunpack.c.h.bf16 %v269
        %v275 = vunpack.c.l.bf16 %v270
        %v276 = vunpack.c.h.bf16 %v270
        %v277 = vunpack.c.l.bf16 %v271
        %v278 = vunpack.c.h.bf16 %v271
        %v279 = vunpack.c.l.bf16 %v272
        %v280 = vunpack.c.h.bf16 %v272
        %v281 = vld [vmem:[%s1] sm:$0xf]
        %v282 = vld [vmem:[%s1 + $0x4] sm:$0xf]
        %v283 = vld [vmem:[%s1 + $0x8] sm:$0xf]
        %v284 = vld [vmem:[%s1 + $0xc] sm:$0xf]
        %v285 = vld [vmem:[%s2] sm:$0xff]
        %v286 = vld [vmem:[%s2 + $0x8] sm:$0xff]
        %v287 = vld [vmem:[%s2 + $0x10] sm:$0xff]
        %v288 = vld [vmem:[%s2 + $0x18] sm:$0xff]
        %290 = vset.pattern.permute.xlu0 0
        %291 = vperm.xlu0 %290, %v285
        %v292 = vpop.permute.xlu0 %291
        %295 = vset.pattern.permute.xlu0 0
        %296 = vperm.xlu0 %295, %v286
        %v297 = vpop.permute.xlu0 %296
        %300 = vset.pattern.permute.xlu0 0
        %301 = vperm.xlu0 %300, %v287
        %v302 = vpop.permute.xlu0 %301
        %305 = vset.pattern.permute.xlu0 0
        %306 = vperm.xlu0 %305, %v288
        %v307 = vpop.permute.xlu0 %306
        %v313 = vunpack.c.l.b16 %v281
        %v314 = vunpack.c.l.b16 %v282
        %v315 = vunpack.c.l.b16 %v283
        %v316 = vunpack.c.l.b16 %v284
        %v317 = vpack.c.b16 %v314, %v313
        %v318 = vpack.c.b16 %v316, %v315
        %v323 = vunpack.c.l.b16 %v269
        %v324 = vunpack.c.h.b16 %v269
        %v325 = vunpack.c.l.b16 %v270
        %v326 = vunpack.c.h.b16 %v270
        %v327 = vunpack.c.l.b16 %v271
        %v328 = vunpack.c.h.b16 %v271
        %v329 = vunpack.c.l.b16 %v272
        %v330 = vunpack.c.h.b16 %v272
        %v331 = vpack.c.b16 %v325, %v323
        %v332 = vpack.c.b16 %v326, %v324
        %v333 = vpack.c.b16 %v329, %v327
        %v334 = vpack.c.b16 %v330, %v328
        %vm339 = vcmask 261120
        %v341 = vsel %vm339, %v317, 0
        %v344 = vsel %vm339, %v318, 0
        %346 = vmatprep.subr.bf16.mxu0 %v332
        %347 = vmatpush1.bf16.msra.mxu0 %v331
        %348 = vmatprep.subr.bf16.mxu0 %v334
        %349 = vmatpush1.bf16.msra.mxu0 %v333
        %350 = vmatprep.subr.bf16.mxu0 0
        %351 = vmatpush1.bf16.msra.mxu0 0
        %352 = vmatprep.subr.bf16.mxu0 0
        %353 = vmatpush1.bf16.msra.mxu0 0
        %354 = vmatprep.subr.bf16.mxu0 0
        %355 = vmatpush1.bf16.msra.mxu0 0
        %356 = vmatprep.subr.bf16.mxu0 0
        %357 = vmatpush1.bf16.msra.mxu0 0
        %358 = vmatprep.subr.bf16.mxu0 0
        %359 = vmatpush1.bf16.msra.mxu0 0
        %360 = vmatprep.subr.bf16.mxu0 0
        %361 = vmatpush1.bf16.msra.mxu0 0
        %362 = vmatprep.subr.bf16.mxu0 0
        %363 = vmatpush1.bf16.msra.mxu0 0
        %364 = vmatprep.subr.bf16.mxu0 0
        %365 = vmatpush1.bf16.msra.mxu0 0
        %366 = vmatprep.subr.bf16.mxu0 0
        %367 = vmatpush1.bf16.msra.mxu0 0
        %368 = vmatprep.subr.bf16.mxu0 0
        %369 = vmatpush1.bf16.msra.mxu0 0
        %370 = vmatprep.subr.bf16.mxu0 0
        %371 = vmatpush1.bf16.msra.mxu0 0
        %372 = vmatprep.subr.bf16.mxu0 0
        %373 = vmatpush1.bf16.msra.mxu0 0
        %374 = vmatprep.subr.bf16.mxu0 0
        %375 = vmatpush1.bf16.msra.mxu0 0
        %376 = vmatprep.subr.bf16.mxu0 0
        %377 = vmatpush1.bf16.msra.mxu0 0
        %378 = vmatprep.mubr.bf16.mxu0 0
        %379 = vmatmul.mubr.bf16.gmra.mrb[0].mxu0 %v341
        %v380 = vpop.f32.mrb[0].mxu0
        %v381 = vadd.f32 %v292, %v380
        %v382 = vpop.f32.mrb[0].mxu0
        %v383 = vadd.f32 %v292, %v382
        %v384 = vpop.f32.mrb[0].mxu0
        %v385 = vadd.f32 %v297, %v384
        %v386 = vpop.f32.mrb[0].mxu0
        %v387 = vadd.f32 %v297, %v386
        %388 = vmatprep.mubr.bf16.mxu0 0
        %389 = vmatmul.mubr.bf16.gmra.mrb[0].mxu0 %v344
        %v390 = vpop.f32.mrb[0].mxu0
        %v391 = vadd.f32 %v302, %v390
        %v392 = vpop.f32.mrb[0].mxu0
        %v393 = vadd.f32 %v302, %v392
        %v394 = vpop.f32.mrb[0].mxu0
        %v395 = vadd.f32 %v307, %v394
        %v396 = vpop.f32.mrb[0].mxu0
        %v397 = vadd.f32 %v307, %v396
        %398 = vdwg.mxu0
        %v399 = vmax.f32 %v381, 0.0
        %v400 = vmax.f32 %v383, 0.0
        %v401 = vmax.f32 %v385, 0.0
        %v402 = vmax.f32 %v387, 0.0
        %v403 = vmax.f32 %v391, 0.0
        %v404 = vmax.f32 %v393, 0.0
        %v405 = vmax.f32 %v395, 0.0
        %v406 = vmax.f32 %v397, 0.0
        %v407 = vld [vmem:[%s3] sm:$0xf]
        %v408 = vld [vmem:[%s3 + $0x4] sm:$0xf]
        %v409 = vld [vmem:[%s3 + $0x8] sm:$0xf]
        %v410 = vld [vmem:[%s3 + $0xc] sm:$0xf]
        %v411 = vpack.c.bf16 %v401, %v399
        %v412 = vpack.c.bf16 %v402, %v400
        %v413 = vpack.c.bf16 %v405, %v403
        %v414 = vpack.c.bf16 %v406, %v404
        %v415 = vld [vmem:[%s4] sm:$0xff]
        %v416 = vld [vmem:[%s4 + $0x8] sm:$0xff]
        %v417 = vld [vmem:[%s4 + $0x10] sm:$0xff]
        %v418 = vld [vmem:[%s4 + $0x18] sm:$0xff]
        %420 = vset.pattern.permute.xlu0 0
        %421 = vperm.xlu0 %420, %v415
        %v422 = vpop.permute.xlu0 %421
        %425 = vset.pattern.permute.xlu0 0
        %426 = vperm.xlu0 %425, %v416
        %v427 = vpop.permute.xlu0 %426
        %430 = vset.pattern.permute.xlu0 0
        %431 = vperm.xlu0 %430, %v417
        %v432 = vpop.permute.xlu0 %431
        %435 = vset.pattern.permute.xlu0 0
        %436 = vperm.xlu0 %435, %v418
        %v437 = vpop.permute.xlu0 %436
        %v443 = vunpack.c.l.b16 %v407
        %v444 = vunpack.c.l.b16 %v408
        %v445 = vunpack.c.l.b16 %v409
        %v446 = vunpack.c.l.b16 %v410
        %v447 = vpack.c.b16 %v444, %v443
        %v448 = vpack.c.b16 %v446, %v445
        %v450 = vsel %vm339, %v447, 0
        %v453 = vsel %vm339, %v448, 0
        %455 = vmatprep.subr.bf16.mxu0 %v412
        %456 = vmatpush1.bf16.msra.mxu0 %v411
        %457 = vmatprep.subr.bf16.mxu0 %v414
        %458 = vmatpush1.bf16.msra.mxu0 %v413
        %459 = vmatprep.subr.bf16.mxu0 0
        %460 = vmatpush1.bf16.msra.mxu0 0
        %461 = vmatprep.subr.bf16.mxu0 0
        %462 = vmatpush1.bf16.msra.mxu0 0
        %463 = vmatprep.subr.bf16.mxu0 0
        %464 = vmatpush1.bf16.msra.mxu0 0
        %465 = vmatprep.subr.bf16.mxu0 0
        %466 = vmatpush1.bf16.msra.mxu0 0
        %467 = vmatprep.subr.bf16.mxu0 0
        %468 = vmatpush1.bf16.msra.mxu0 0
        %469 = vmatprep.subr.bf16.mxu0 0
        %470 = vmatpush1.bf16.msra.mxu0 0
        %471 = vmatprep.subr.bf16.mxu0 0
        %472 = vmatpush1.bf16.msra.mxu0 0
        %473 = vmatprep.subr.bf16.mxu0 0
        %474 = vmatpush1.bf16.msra.mxu0 0
        %475 = vmatprep.subr.bf16.mxu0 0
        %476 = vmatpush1.bf16.msra.mxu0 0
        %477 = vmatprep.subr.bf16.mxu0 0
        %478 = vmatpush1.bf16.msra.mxu0 0
        %479 = vmatprep.subr.bf16.mxu0 0
        %480 = vmatpush1.bf16.msra.mxu0 0
        %481 = vmatprep.subr.bf16.mxu0 0
        %482 = vmatpush1.bf16.msra.mxu0 0
        %483 = vmatprep.subr.bf16.mxu0 0
        %484 = vmatpush1.bf16.msra.mxu0 0
        %485 = vmatprep.subr.bf16.mxu0 0
        %486 = vmatpush1.bf16.msra.mxu0 0
        %487 = vmatprep.mubr.bf16.mxu0 0
        %488 = vmatmul.mubr.bf16.gmra.mrb[0].mxu0 %v450
        %v489 = vpop.f32.mrb[0].mxu0
        %v490 = vadd.f32 %v422, %v489
        %v491 = vpop.f32.mrb[0].mxu0
        %v492 = vadd.f32 %v422, %v491
        %v493 = vpop.f32.mrb[0].mxu0
        %v494 = vadd.f32 %v427, %v493
        %v495 = vpop.f32.mrb[0].mxu0
        %v496 = vadd.f32 %v427, %v495
        %497 = vmatprep.mubr.bf16.mxu0 0
        %498 = vmatmul.mubr.bf16.gmra.mrb[0].mxu0 %v453
        %v499 = vpop.f32.mrb[0].mxu0
        %v500 = vadd.f32 %v432, %v499
        %v501 = vpop.f32.mrb[0].mxu0
        %v502 = vadd.f32 %v432, %v501
        %v503 = vpop.f32.mrb[0].mxu0
        %v504 = vadd.f32 %v437, %v503
        %v505 = vpop.f32.mrb[0].mxu0
        %v506 = vadd.f32 %v437, %v505
        %507 = vdwg.mxu0
        %v508 = vmax.f32 %v490, 0.0
        %v509 = vmax.f32 %v492, 0.0
        %v510 = vmax.f32 %v494, 0.0
        %v511 = vmax.f32 %v496, 0.0
        %v512 = vmax.f32 %v500, 0.0
        %v513 = vmax.f32 %v502, 0.0
        %v514 = vmax.f32 %v504, 0.0
        %v515 = vmax.f32 %v506, 0.0
        %v516 = vadd.f32 %v508, %v273
        %v517 = vadd.f32 %v509, %v274
        %v518 = vadd.f32 %v510, %v275
        %v519 = vadd.f32 %v511, %v276
        %v520 = vadd.f32 %v512, %v277
        %v521 = vadd.f32 %v513, %v278
        %v522 = vadd.f32 %v514, %v279
        %v523 = vadd.f32 %v515, %v280
        %v524 = vmax.f32 %v516, 0.0
        %v525 = vmax.f32 %v517, 0.0
        %v526 = vmax.f32 %v518, 0.0
        %v527 = vmax.f32 %v519, 0.0
        %v528 = vmax.f32 %v520, 0.0
        %v529 = vmax.f32 %v521, 0.0
        %v530 = vmax.f32 %v522, 0.0
        %v531 = vmax.f32 %v523, 0.0
        %v532 = vpack.c.bf16 %v526, %v524
        %v533 = vpack.c.bf16 %v527, %v525
        %v534 = vpack.c.bf16 %v530, %v528
        %v535 = vpack.c.bf16 %v531, %v529
        %s536 = scalar_lea.vmem %s1, 16
        %v537 = vld [vmem:[%s536] sm:$0xf]
        %v538 = vld [vmem:[%s536 + $0x4] sm:$0xf]
        %v539 = vld [vmem:[%s536 + $0x8] sm:$0xf]
        %v540 = vld [vmem:[%s536 + $0xc] sm:$0xf]
        %s541 = scalar_lea.vmem %s2, 32
        %v542 = vld [vmem:[%s541] sm:$0xff]
        %v543 = vld [vmem:[%s541 + $0x8] sm:$0xff]
        %v544 = vld [vmem:[%s541 + $0x10] sm:$0xff]
        %v545 = vld [vmem:[%s541 + $0x18] sm:$0xff]
        %547 = vset.pattern.permute.xlu0 0
        %548 = vperm.xlu0 %547, %v542
        %v549 = vpop.permute.xlu0 %548
        %552 = vset.pattern.permute.xlu0 0
        %553 = vperm.xlu0 %552, %v543
        %v554 = vpop.permute.xlu0 %553
        %557 = vset.pattern.permute.xlu0 0
        %558 = vperm.xlu0 %557, %v544
        %v559 = vpop.permute.xlu0 %558
        %562 = vset.pattern.permute.xlu0 0
        %563 = vperm.xlu0 %562, %v545
        %v564 = vpop.permute.xlu0 %563
        %v570 = vunpack.c.l.b16 %v537
        %v571 = vunpack.c.l.b16 %v538
        %v572 = vunpack.c.l.b16 %v539
        %v573 = vunpack.c.l.b16 %v540
        %v574 = vpack.c.b16 %v571, %v570
        %v575 = vpack.c.b16 %v573, %v572
        %v577 = vsel %vm339, %v574, 0
        %v580 = vsel %vm339, %v575, 0
        %582 = vmatprep.subr.bf16.mxu0 %v533
        %583 = vmatpush1.bf16.msra.mxu0 %v532
        %584 = vmatprep.subr.bf16.mxu0 %v535
        %585 = vmatpush1.bf16.msra.mxu0 %v534
        %586 = vmatprep.subr.bf16.mxu0 0
        %587 = vmatpush1.bf16.msra.mxu0 0
        %588 = vmatprep.subr.bf16.mxu0 0
        %589 = vmatpush1.bf16.msra.mxu0 0
        %590 = vmatprep.subr.bf16.mxu0 0
        %591 = vmatpush1.bf16.msra.mxu0 0
        %592 = vmatprep.subr.bf16.mxu0 0
        %593 = vmatpush1.bf16.msra.mxu0 0
        %594 = vmatprep.subr.bf16.mxu0 0
        %595 = vmatpush1.bf16.msra.mxu0 0
        %596 = vmatprep.subr.bf16.mxu0 0
        %597 = vmatpush1.bf16.msra.mxu0 0
        %598 = vmatprep.subr.bf16.mxu0 0
        %599 = vmatpush1.bf16.msra.mxu0 0
        %600 = vmatprep.subr.bf16.mxu0 0
        %601 = vmatpush1.bf16.msra.mxu0 0
        %602 = vmatprep.subr.bf16.mxu0 0
        %603 = vmatpush1.bf16.msra.mxu0 0
        %604 = vmatprep.subr.bf16.mxu0 0
        %605 = vmatpush1.bf16.msra.mxu0 0
        %606 = vmatprep.subr.bf16.mxu0 0
        %607 = vmatpush1.bf16.msra.mxu0 0
        %608 = vmatprep.subr.bf16.mxu0 0
        %609 = vmatpush1.bf16.msra.mxu0 0
        %610 = vmatprep.subr.bf16.mxu0 0
        %611 = vmatpush1.bf16.msra.mxu0 0
        %612 = vmatprep.subr.bf16.mxu0 0
        %613 = vmatpush1.bf16.msra.mxu0 0
        %614 = vmatprep.mubr.bf16.mxu0 0
        %615 = vmatmul.mubr.bf16.gmra.mrb[0].mxu0 %v577
        %v616 = vpop.f32.mrb[0].mxu0
        %v617 = vadd.f32 %v549, %v616
        %v618 = vpop.f32.mrb[0].mxu0
        %v619 = vadd.f32 %v549, %v618
        %v620 = vpop.f32.mrb[0].mxu0
        %v621 = vadd.f32 %v554, %v620
        %v622 = vpop.f32.mrb[0].mxu0
        %v623 = vadd.f32 %v554, %v622
        %624 = vmatprep.mubr.bf16.mxu0 0
        %625 = vmatmul.mubr.bf16.gmra.mrb[0].mxu0 %v580
        %v626 = vpop.f32.mrb[0].mxu0
        %v627 = vadd.f32 %v559, %v626
        %v628 = vpop.f32.mrb[0].mxu0
        %v629 = vadd.f32 %v559, %v628
        %v630 = vpop.f32.mrb[0].mxu0
        %v631 = vadd.f32 %v564, %v630
        %v632 = vpop.f32.mrb[0].mxu0
        %v633 = vadd.f32 %v564, %v632
        %634 = vdwg.mxu0
        %v635 = vmax.f32 %v617, 0.0
        %v636 = vmax.f32 %v619, 0.0
        %v637 = vmax.f32 %v621, 0.0
        %v638 = vmax.f32 %v623, 0.0
        %v639 = vmax.f32 %v627, 0.0
        %v640 = vmax.f32 %v629, 0.0
        %v641 = vmax.f32 %v631, 0.0
        %v642 = vmax.f32 %v633, 0.0
        %s643 = scalar_lea.vmem %s3, 16
        %v644 = vld [vmem:[%s643] sm:$0xf]
        %v645 = vld [vmem:[%s643 + $0x4] sm:$0xf]
        %v646 = vld [vmem:[%s643 + $0x8] sm:$0xf]
        %v647 = vld [vmem:[%s643 + $0xc] sm:$0xf]
        %v648 = vpack.c.bf16 %v637, %v635
        %v649 = vpack.c.bf16 %v638, %v636
        %v650 = vpack.c.bf16 %v641, %v639
        %v651 = vpack.c.bf16 %v642, %v640
        %s652 = scalar_lea.vmem %s4, 32
        %v653 = vld [vmem:[%s652] sm:$0xff]
        %v654 = vld [vmem:[%s652 + $0x8] sm:$0xff]
        %v655 = vld [vmem:[%s652 + $0x10] sm:$0xff]
        %v656 = vld [vmem:[%s652 + $0x18] sm:$0xff]
        %658 = vset.pattern.permute.xlu0 0
        %659 = vperm.xlu0 %658, %v653
        %v660 = vpop.permute.xlu0 %659
        %663 = vset.pattern.permute.xlu0 0
        %664 = vperm.xlu0 %663, %v654
        %v665 = vpop.permute.xlu0 %664
        %668 = vset.pattern.permute.xlu0 0
        %669 = vperm.xlu0 %668, %v655
        %v670 = vpop.permute.xlu0 %669
        %673 = vset.pattern.permute.xlu0 0
        %674 = vperm.xlu0 %673, %v656
        %v675 = vpop.permute.xlu0 %674
        %v681 = vunpack.c.l.b16 %v644
        %v682 = vunpack.c.l.b16 %v645
        %v683 = vunpack.c.l.b16 %v646
        %v684 = vunpack.c.l.b16 %v647
        %v685 = vpack.c.b16 %v682, %v681
        %v686 = vpack.c.b16 %v684, %v683
        %v688 = vsel %vm339, %v685, 0
        %v691 = vsel %vm339, %v686, 0
        %693 = vmatprep.subr.bf16.mxu0 %v649
        %694 = vmatpush1.bf16.msra.mxu0 %v648
        %695 = vmatprep.subr.bf16.mxu0 %v651
        %696 = vmatpush1.bf16.msra.mxu0 %v650
        %697 = vmatprep.subr.bf16.mxu0 0
        %698 = vmatpush1.bf16.msra.mxu0 0
        %699 = vmatprep.subr.bf16.mxu0 0
        %700 = vmatpush1.bf16.msra.mxu0 0
        %701 = vmatprep.subr.bf16.mxu0 0
        %702 = vmatpush1.bf16.msra.mxu0 0
        %703 = vmatprep.subr.bf16.mxu0 0
        %704 = vmatpush1.bf16.msra.mxu0 0
        %705 = vmatprep.subr.bf16.mxu0 0
        %706 = vmatpush1.bf16.msra.mxu0 0
        %707 = vmatprep.subr.bf16.mxu0 0
        %708 = vmatpush1.bf16.msra.mxu0 0
        %709 = vmatprep.subr.bf16.mxu0 0
        %710 = vmatpush1.bf16.msra.mxu0 0
        %711 = vmatprep.subr.bf16.mxu0 0
        %712 = vmatpush1.bf16.msra.mxu0 0
        %713 = vmatprep.subr.bf16.mxu0 0
        %714 = vmatpush1.bf16.msra.mxu0 0
        %715 = vmatprep.subr.bf16.mxu0 0
        %716 = vmatpush1.bf16.msra.mxu0 0
        %717 = vmatprep.subr.bf16.mxu0 0
        %718 = vmatpush1.bf16.msra.mxu0 0
        %719 = vmatprep.subr.bf16.mxu0 0
        %720 = vmatpush1.bf16.msra.mxu0 0
        %721 = vmatprep.subr.bf16.mxu0 0
        %722 = vmatpush1.bf16.msra.mxu0 0
        %723 = vmatprep.subr.bf16.mxu0 0
        %724 = vmatpush1.bf16.msra.mxu0 0
        %725 = vmatprep.mubr.bf16.mxu0 0
        %726 = vmatmul.mubr.bf16.gmra.mrb[0].mxu0 %v688
        %v727 = vpop.f32.mrb[0].mxu0
        %v728 = vadd.f32 %v660, %v727
        %v729 = vpop.f32.mrb[0].mxu0
        %v730 = vadd.f32 %v660, %v729
        %v731 = vpop.f32.mrb[0].mxu0
        %v732 = vadd.f32 %v665, %v731
        %v733 = vpop.f32.mrb[0].mxu0
        %v734 = vadd.f32 %v665, %v733
        %735 = vmatprep.mubr.bf16.mxu0 0
        %736 = vmatmul.mubr.bf16.gmra.mrb[0].mxu0 %v691
        %v737 = vpop.f32.mrb[0].mxu0
        %v738 = vadd.f32 %v670, %v737
        %v739 = vpop.f32.mrb[0].mxu0
        %v740 = vadd.f32 %v670, %v739
        %v741 = vpop.f32.mrb[0].mxu0
        %v742 = vadd.f32 %v675, %v741
        %v743 = vpop.f32.mrb[0].mxu0
        %v744 = vadd.f32 %v675, %v743
        %745 = vdwg.mxu0
        %v746 = vmax.f32 %v728, 0.0
        %v747 = vmax.f32 %v730, 0.0
        %v748 = vmax.f32 %v732, 0.0
        %v749 = vmax.f32 %v734, 0.0
        %v750 = vmax.f32 %v738, 0.0
        %v751 = vmax.f32 %v740, 0.0
        %v752 = vmax.f32 %v742, 0.0
        %v753 = vmax.f32 %v744, 0.0
        %v754 = vadd.f32 %v746, %v524
        %v755 = vadd.f32 %v747, %v525
        %v756 = vadd.f32 %v748, %v526
        %v757 = vadd.f32 %v749, %v527
        %v758 = vadd.f32 %v750, %v528
        %v759 = vadd.f32 %v751, %v529
        %v760 = vadd.f32 %v752, %v530
        %v761 = vadd.f32 %v753, %v531
        %v762 = vmax.f32 %v754, 0.0
        %v763 = vmax.f32 %v755, 0.0
        %v764 = vmax.f32 %v756, 0.0
        %v765 = vmax.f32 %v757, 0.0
        %v766 = vmax.f32 %v758, 0.0
        %v767 = vmax.f32 %v759, 0.0
        %v768 = vmax.f32 %v760, 0.0
        %v769 = vmax.f32 %v761, 0.0
        %770 = vst [vmem:[%s265] sm:$0xff] %v762
        %771 = vst [vmem:[%s265 + $0x8] sm:$0xff] %v763
        %772 = vst [vmem:[%s265 + $0x10] sm:$0xff] %v764
        %773 = vst [vmem:[%s265 + $0x18] sm:$0xff] %v765
        %774 = vst [vmem:[%s265 + $0x20] sm:$0xff] %v766
        %775 = vst [vmem:[%s265 + $0x28] sm:$0xff] %v767
        %776 = vst [vmem:[%s265 + $0x30] sm:$0xff] %v768
        %777 = vst [vmem:[%s265 + $0x38] sm:$0xff] %v769
        %s778 = sand.u32 %s134, 1
        %s779 = sand.u32 %s134, 1
        %s780 = smul.addr %s779, 64
        %s781 = scalar_lea.vmem [#allocation3], %s780
        // Predicated region
        $region79: #{pos_extraction_forward.1} parent=73 // pred_check
          %p782 = pneg %p144
        $region80: #{pos_extraction_forward.1} parent=73 // pred_check_branch
          %784 = sbr.rel (%p782) target = $region82
        $region81: #{pos_extraction_forward.1} parent=73 // pred_region
          %s785 = smul.u32 2, %s16
          %s786 = smul.addr %s785, 8
          %s787 = scalar_lea.vmem %s5, %s786
          // Predicated region
          $region83: #{pos_extraction_forward.1} parent=81 // pred_check
            _
          $region84: #{pos_extraction_forward.1} parent=81 // pred_check_branch
            %789 = sbr.rel (0) target = $region86
          $region85: #{pos_extraction_forward.1} parent=81 // pred_region
            // Predicated region
            $region87: #{pos_extraction_forward.1} parent=85 // pred_check
              _
            $region88: #{pos_extraction_forward.1} parent=85 // pred_check_branch
              %791 = sbr.rel (0) target = $region90
            $region89: #{pos_extraction_forward.1} parent=85 // pred_region
              loop: start=0, step=1, limit=1
              $region91: #{pos_extraction_forward.1} parent=89 // loop_pre_header
                _
              $region92: #{pos_extraction_forward.1} parent=89 // loop_header
                %s793 = sphi 0, %s797
                %p794 = scmp.ge.s32.totalorder %s793, 1
                %s798 = sphi %s781, %s781
                %s799 = sphi %s787, %s787
              $region93: #{pos_extraction_forward.1} parent=89 // loop_header_branch
                %796 = sbr.rel (%p794) target = $region97
              $region94: #{pos_extraction_forward.1} parent=89 // loop_body
                %v800 = vld [vmem:[%s798] sm:$0xff]
                %801 = vst [vmem:[%s799] sm:$0xff] %v800
                %v802 = vld [vmem:[%s798 + $0x8] sm:$0xff]
                %803 = vst [vmem:[%s799 + $0x8] sm:$0xff] %v802
                %v804 = vld [vmem:[%s798 + $0x10] sm:$0xff]
                %805 = vst [vmem:[%s799 + $0x20] sm:$0xff] %v804
                %v806 = vld [vmem:[%s798 + $0x18] sm:$0xff]
                %807 = vst [vmem:[%s799 + $0x28] sm:$0xff] %v806
                %v808 = vld [vmem:[%s798 + $0x20] sm:$0xff]
                %809 = vst [vmem:[%s799 + $0x40] sm:$0xff] %v808
                %v810 = vld [vmem:[%s798 + $0x28] sm:$0xff]
                %811 = vst [vmem:[%s799 + $0x48] sm:$0xff] %v810
                %v812 = vld [vmem:[%s798 + $0x30] sm:$0xff]
                %813 = vst [vmem:[%s799 + $0x60] sm:$0xff] %v812
                %v814 = vld [vmem:[%s798 + $0x38] sm:$0xff]
                %815 = vst [vmem:[%s799 + $0x68] sm:$0xff] %v814
              $region95: #{pos_extraction_forward.1} parent=89 // loop_footer
                %s797 = sadd.s32 1, %s793
              $region96: #{pos_extraction_forward.1} parent=89 // loop_footer_branch
                %792 = sbr.rel target = $region92
              $region97: #{pos_extraction_forward.1} parent=89 // loop_exit
                _
            $region90: #{pos_extraction_forward.1} parent=85 // pred_fallthru
              _
            // Predicated region
            $region98: #{pos_extraction_forward.1} parent=85 // pred_check
              _
            $region99: #{pos_extraction_forward.1} parent=85 // pred_check_branch
              %817 = sbr.rel target = $region101
            $region100: #{pos_extraction_forward.1} parent=85 // pred_region
              _
            $region101: #{pos_extraction_forward.1} parent=85 // pred_fallthru
              _
          $region86: #{pos_extraction_forward.1} parent=81 // pred_fallthru
            _
          %818 = vnop
        $region82: #{pos_extraction_forward.1} parent=73 // pred_fallthru
          _
      $region74: #{pos_extraction_forward.1} parent=5 // pred_fallthru
        _
      %p819 = scmp.le.s32.totalorder 2, %s11
      // Predicated region
      $region102: #{pos_extraction_forward.1} parent=5 // pred_check
        %p820 = pneg %p819
      $region103: #{pos_extraction_forward.1} parent=5 // pred_check_branch
        %822 = sbr.rel (%p820) target = $region105
      $region104: #{pos_extraction_forward.1} parent=5 // pred_region
        %s823 = ssub.s32 %s11, 2
        // Predicated region
        $region106: #{pos_extraction_forward.1} parent=104 // pred_check
          %p824 = pneg %p150
        $region107: #{pos_extraction_forward.1} parent=104 // pred_check_branch
          %826 = sbr.rel (%p824) target = $region109
        $region108: #{pos_extraction_forward.1} parent=104 // pred_region
          %s827 = sand.u32 %s135, 1
          %s828 = sand.u32 %s135, 1
          %s829 = smul.addr %s828, 64
          %s830 = scalar_lea.vmem [#allocation3], %s829
        $region109: #{pos_extraction_forward.1} parent=104 // pred_fallthru
          _
      $region105: #{pos_extraction_forward.1} parent=5 // pred_fallthru
        _
    $region6: #{pos_extraction_forward.1} parent=1 // loop_footer
      %s15 = sadd.s32 1, %s11
    $region7: #{pos_extraction_forward.1} parent=1 // loop_footer_branch
      %10 = sbr.rel target = $region3
    $region8: #{pos_extraction_forward.1} parent=1 // loop_exit
      _

</llo_original>
